<compile_context>
chip_gen: v7x
topology: tpu7x:2x2x1
jax: 0.10.0
libtpu: 0.0.40
codegen_flags: <defaults>
</compile_context>

<pallas_src>
import jax
import jax.numpy as jnp
from jax.experimental import pallas as pl
from jax.experimental.pallas import tpu as pltpu


def _make_cam_kernel(hw: int):
    """Build the kernel body; HW is static (closure)."""
    inv_hw = 1.0 / float(hw)

    def cam_kernel(x_ref, w1t_ref, w2t_ref, o_ref):
        # x_ref: (nb, C, HW)   w1t_ref: (C, Cr)   w2t_ref: (Cr, C)   o_ref: (nb, C, HW)
        nb = x_ref.shape[0]

        # Global average / max pooling over the spatial (lane) axis.
        # Sum accumulates in f32; max stays in the native dtype.  No f32 copy
        # of the full block is materialized.
        avg = jnp.sum(x_ref[...], axis=-1, dtype=jnp.float32) * inv_hw     # (nb, C)
        mx = jnp.max(x_ref[...], axis=-1).astype(jnp.float32)              # (nb, C)

        # Shared 1x1-conv MLP applied to both pooled vectors with ONE matmul
        # per weight: stack avg and max rows -> (2*nb, C).
        pooled = jnp.concatenate([avg, mx], axis=0)                        # (2nb, C)
        h = jnp.maximum(
            jnp.dot(pooled, w1t_ref[...],
                    preferred_element_type=jnp.float32), 0.0)              # (2nb, Cr)
        att = jnp.dot(h, w2t_ref[...],
                      preferred_element_type=jnp.float32)                  # (2nb, C)

        v = jax.nn.sigmoid(att[:nb] + att[nb:])                            # (nb, C)

        # Per-channel scale broadcast over HW, in the native dtype.
        o_ref[...] = x_ref[...] * v.astype(o_ref.dtype)[:, :, None]

    return cam_kernel


def _detect_tpu(default_vmem_bytes=64 << 20, default_num_cores=1):
    """Best-effort HW query; conservative fallbacks (v7x-sized VMEM, 1 TC)."""
    vmem, cores = default_vmem_bytes, default_num_cores
    try:
        info = pltpu.get_tpu_info()
        for name in ("vmem_capacity_bytes", "vmem_bytes", "vmem_size_bytes"):
            val = getattr(info, name, None)
            if val:
                vmem = int(val)
                break
        for name in ("num_tensorcores", "tensorcores_per_chip", "num_cores",
                     "core_count"):
            val = getattr(info, name, None)
            if val:
                cores = int(val)
                break
    except Exception:
        pass
    return vmem, cores


def _choose_block_batch(n, bytes_per_pair, pair_budget_bytes, num_cores):
    """Largest per-step batch whose (in+out) pair fits the budget.

    Single-TC chips: fewest, biggest steps.  Multi-TC (megacore): round the
    step count up to a multiple of the core count so the 'parallel' batch
    axis keeps every TensorCore busy."""
    nb = max(1, min(n, pair_budget_bytes // max(1, bytes_per_pair)))
    steps = -(-n // nb)
    if num_cores > 1 and n > 1 and steps % num_cores != 0:
        steps = min(n, ((steps + num_cores - 1) // num_cores) * num_cores)
        nb = -(-n // steps)
    return nb


def cam_block_conv(x, w1, w2, *,
                   vmem_limit_bytes=None,
                   block_pair_budget_bytes=None):
    """x: (N, C, H, W); w1: (C//ratio, C); w2: (C, C//ratio). Returns (N, C, H, W)."""
    N, C, H, W = x.shape
    HW = H * W
    Cr = w1.shape[0]

    # Lane-dense (N, C, HW) layout.  Contiguous reshape -> metadata only,
    # no HBM copy (and no pad / slice round-trips).
    x_flat = x.reshape(N, C, HW)

    # Pre-transpose weights once in XLA (no in-kernel transposes).
    w1t = jnp.asarray(w1).T  # (C, Cr)
    w2t = jnp.asarray(w2).T  # (Cr, C)

    vmem_cap, num_cores = _detect_tpu()
    if vmem_limit_bytes is None:
        # Headroom below physical VMEM (64 MiB on v7x, 128 MiB on v5e/v6e).
        vmem_limit_bytes = int(max(32 << 20, min(vmem_cap - (8 << 20), 112 << 20)))
    if block_pair_budget_bytes is None:
        # Per-step (input + output) pair; double-buffered => ~2x in flight.
        block_pair_budget_bytes = max(4 << 20, (vmem_limit_bytes - (4 << 20)) // 2)

    itemsize = x.dtype.itemsize
    bytes_per_pair = 2 * C * HW * itemsize                 # one sample: in + out
    # TODO(synk): if a single sample's (C, HW) slab exceeds the budget (hit
    # first on v7x's 64 MiB VMEM), add an in-block pltpu.emit_pipeline over HW
    # chunks: pass 1 accumulates sum/max into (nb, C) scratch, pass 2 scales.
    nb = _choose_block_batch(N, bytes_per_pair, block_pair_budget_bytes, num_cores)
    grid = (pl.cdiv(N, nb),)

    kernel = _make_cam_kernel(HW)

    cost = pl.CostEstimate(
        flops=3 * N * C * HW + 8 * N * C * Cr,
        transcendentals=2 * N * C,
        bytes_accessed=2 * N * C * HW * itemsize + 2 * C * Cr * 4,
    )

    out_flat = pl.pallas_call(
        kernel,
        out_shape=jax.ShapeDtypeStruct((N, C, HW), x.dtype),
        grid_spec=pltpu.PrefetchScalarGridSpec(
            num_scalar_prefetch=0,
            grid=grid,
            in_specs=[
                # Last two block dims equal the full (C, HW) extents -> no
                # (8,128) divisibility requirement, no padding needed.
                pl.BlockSpec((nb, C, HW), lambda n: (n, 0, 0)),
                pl.BlockSpec((C, Cr), lambda n: (0, 0)),
                pl.BlockSpec((Cr, C), lambda n: (0, 0)),
            ],
            out_specs=pl.BlockSpec((nb, C, HW), lambda n: (n, 0, 0)),
        ),
        compiler_params=pltpu.CompilerParams(
            dimension_semantics=("parallel",),
            vmem_limit_bytes=int(vmem_limit_bytes),
        ),
        cost_estimate=cost,
    )(x_flat, w1t, w2t)

    return out_flat.reshape(N, C, H, W)


def reference(x, w1, w2):
    # Pure-JAX reference of the PyTorch forward.
    avg = jnp.mean(x, axis=(2, 3))                          # (N, C)
    mx = jnp.max(x, axis=(2, 3))                            # (N, C)

    def mlp(p):                                             # p: (N, C)
        h = jnp.maximum(p @ w1.T, 0.0)                      # (N, Cr)
        return h @ w2.T                                     # (N, C)

    v = jax.nn.sigmoid(mlp(avg) + mlp(mx))                  # (N, C)
    return x * v[:, :, None, None]


if __name__ == "__main__":
    # Small shapes consistent with the module: batch=2, channels=64 (ratio=16
    # => reduced channels 4), 16x16 spatial.
    N, C, H, W = 2, 64, 16, 16
    ratio = 16
    Cr = C // ratio

    key = jax.random.PRNGKey(0)
    kx, k1, k2 = jax.random.split(key, 3)

    x = jax.random.normal(kx, (N, C, H, W), dtype=jnp.float32)

    # Kaiming-normal init (mode='fan_out') for 1x1 convs with no bias:
    #   std = sqrt(2 / (out_channels * kH * kW)) = sqrt(2 / out_channels)
    w1 = jax.random.normal(k1, (Cr, C), dtype=jnp.float32) * jnp.sqrt(2.0 / Cr)
    w2 = jax.random.normal(k2, (C, Cr), dtype=jnp.float32) * jnp.sqrt(2.0 / C)

    out = jax.block_until_ready(cam_block_conv(x, w1, w2))
    ref = jax.block_until_ready(reference(x, w1, w2))

    assert out.shape == (N, C, H, W)
    assert jnp.allclose(out, ref, atol=1e-5, rtol=1e-5), "mismatch vs reference"
    print("KERNEL_OK")
</pallas_src>

<mosaic_0001>
module attributes {stable_mosaic.version = 11 : i64} {
  func.func @cam_kernel(%arg0: i32, %arg1: memref<2x64x256xf32, #tpu.memory_space<vmem>>, %arg2: memref<64x4xf32, #tpu.memory_space<vmem>>, %arg3: memref<4x64xf32, #tpu.memory_space<vmem>>, %arg4: memref<2x64x256xf32, #tpu.memory_space<vmem>>) attributes {dimension_semantics = [#tpu.dimension_semantics<parallel>], iteration_bounds = array<i64: 1>, scalar_prefetch = 0 : i64, scratch_operands = 0 : i64, tpu.core_type = #tpu.core_type<tc>, window_params = [{transform_indices = @transform_0, window_bounds = array<i64: 2, 64, 256>}, {pipeline_mode = #tpu.pipeline_mode<synchronous>, transform_indices = @transform_1, window_bounds = array<i64: 64, 4>}, {pipeline_mode = #tpu.pipeline_mode<synchronous>, transform_indices = @transform_2, window_bounds = array<i64: 4, 64>}, {transform_indices = @transform_3, window_bounds = array<i64: 2, 64, 256>}]} {
    %c0 = arith.constant 0 : index
    %c0_0 = arith.constant 0 : index
    %c0_1 = arith.constant 0 : index
    %0 = vector.load %arg1[%c0, %c0_0, %c0_1] : memref<2x64x256xf32, #tpu.memory_space<vmem>>, vector<2x64x256xf32>
    %cst = arith.constant dense<0.000000e+00> : vector<2x64xf32>
    %1 = vector.multi_reduction <add>, %0, %cst [2] : vector<2x64x256xf32> to vector<2x64xf32>
    %cst_2 = arith.constant 3.906250e-03 : f32
    %2 = vector.broadcast %cst_2 : f32 to vector<2x64xf32>
    %3 = arith.mulf %1, %2 : vector<2x64xf32>
    %c0_3 = arith.constant 0 : index
    %c0_4 = arith.constant 0 : index
    %c0_5 = arith.constant 0 : index
    %4 = vector.load %arg1[%c0_3, %c0_4, %c0_5] : memref<2x64x256xf32, #tpu.memory_space<vmem>>, vector<2x64x256xf32>
    %cst_6 = arith.constant dense<0xFF800000> : vector<2x64xf32>
    %5 = vector.multi_reduction <maximumf>, %4, %cst_6 [2] : vector<2x64x256xf32> to vector<2x64xf32>
    %6 = tpu.concatenate %3, %5 in 0 : vector<2x64xf32>, vector<2x64xf32> -> vector<4x64xf32>
    %c0_7 = arith.constant 0 : index
    %c0_8 = arith.constant 0 : index
    %7 = vector.load %arg2[%c0_7, %c0_8] : memref<64x4xf32, #tpu.memory_space<vmem>>, vector<64x4xf32>
    %cst_9 = arith.constant dense<0.000000e+00> : vector<4x4xf32>
    %8 = tpu.matmul %6, %7, %cst_9 {dimension_numbers = #tpu.dot_dimension_numbers<[1], [0], [0], [1], [0, 0, 1, 1], [], []>} : vector<4x64xf32>, vector<64x4xf32>, vector<4x4xf32> -> vector<4x4xf32>
    %cst_10 = arith.constant 0.000000e+00 : f32
    %9 = vector.broadcast %cst_10 : f32 to vector<4x4xf32>
    %10 = arith.maximumf %8, %9 : vector<4x4xf32>
    %c0_11 = arith.constant 0 : index
    %c0_12 = arith.constant 0 : index
    %11 = vector.load %arg3[%c0_11, %c0_12] : memref<4x64xf32, #tpu.memory_space<vmem>>, vector<4x64xf32>
    %cst_13 = arith.constant dense<0.000000e+00> : vector<4x64xf32>
    %12 = tpu.matmul %10, %11, %cst_13 {dimension_numbers = #tpu.dot_dimension_numbers<[1], [0], [0], [1], [0, 0, 1, 1], [], []>} : vector<4x4xf32>, vector<4x64xf32>, vector<4x64xf32> -> vector<4x64xf32>
    %13 = vector.extract_strided_slice %12 {offsets = [0, 0], sizes = [2, 64], strides = [1, 1]} : vector<4x64xf32> to vector<2x64xf32>
    %14 = vector.extract_strided_slice %12 {offsets = [2, 0], sizes = [2, 64], strides = [1, 1]} : vector<4x64xf32> to vector<2x64xf32>
    %15 = arith.addf %13, %14 : vector<2x64xf32>
    %16 = arith.negf %15 : vector<2x64xf32>
    %17 = math.exp %16 : vector<2x64xf32>
    %cst_14 = arith.constant 1.000000e+00 : f32
    %18 = vector.broadcast %cst_14 : f32 to vector<2x64xf32>
    %19 = arith.addf %18, %17 : vector<2x64xf32>
    %20 = arith.divf %18, %19 : vector<2x64xf32>
    %c0_15 = arith.constant 0 : index
    %c0_16 = arith.constant 0 : index
    %c0_17 = arith.constant 0 : index
    %21 = vector.load %arg1[%c0_15, %c0_16, %c0_17] : memref<2x64x256xf32, #tpu.memory_space<vmem>>, vector<2x64x256xf32>
    %22 = vector.shape_cast %20 : vector<2x64xf32> to vector<2x64x1xf32>
    %23 = vector.broadcast %22 : vector<2x64x1xf32> to vector<2x64x256xf32>
    %24 = arith.mulf %21, %23 : vector<2x64x256xf32>
    %c0_18 = arith.constant 0 : index
    %c0_19 = arith.constant 0 : index
    %c0_20 = arith.constant 0 : index
    %25 = vector.load %arg4[%c0_18, %c0_19, %c0_20] : memref<2x64x256xf32, #tpu.memory_space<vmem>>, vector<2x64x256xf32>
    tpu.vector_store %arg4[%c0_18, %c0_19, %c0_20], %24 {strides = array<i32>} : memref<2x64x256xf32, #tpu.memory_space<vmem>>, vector<2x64x256xf32>,
    return
  }
  func.func @transform_0(%arg0: i32) -> (i32, i32, i32) {
    %c0_i32 = arith.constant 0 : i32
    %c0_i32_0 = arith.constant 0 : i32
    %c0_i32_1 = arith.constant 0 : i32
    return %arg0, %c0_i32, %c0_i32_0 : i32, i32, i32
  }
  func.func @transform_1(%arg0: i32) -> (i32, i32) {
    %c0_i32 = arith.constant 0 : i32
    %c0_i32_0 = arith.constant 0 : i32
    %c0_i32_1 = arith.constant 0 : i32
    return %c0_i32, %c0_i32_0 : i32, i32
  }
  func.func @transform_2(%arg0: i32) -> (i32, i32) {
    %c0_i32 = arith.constant 0 : i32
    %c0_i32_0 = arith.constant 0 : i32
    %c0_i32_1 = arith.constant 0 : i32
    return %c0_i32, %c0_i32_0 : i32, i32
  }
  func.func @transform_3(%arg0: i32) -> (i32, i32, i32) {
    %c0_i32 = arith.constant 0 : i32
    %c0_i32_0 = arith.constant 0 : i32
    %c0_i32_1 = arith.constant 0 : i32
    return %arg0, %c0_i32, %c0_i32_0 : i32, i32, i32
  }
}

</mosaic_0001>

<llo_original>
// kernel: tpu_custom_call.1
$region0: #{tpu_custom_call.1}
  #allocation0 [shape = 'u32[]', space=smem, size = 0x4, offset = 0x4, fixed_abs, tag = 'smem constant byte address 0x4 - core index']
  #allocation1 [shape = 'u32[144,128]{1,0:T(1,128)}', space=vmem, size = 0x12000, scoped, tag = 'internal scratch']
  %s0 = inlined_call_operand.hbm [shape: f32[2,64,256], index: 0, kind: input, shape index: {}]
  %s1 = inlined_call_operand.vmem [shape: f32[64,4], index: 1, kind: input, shape index: {}]
  %s2 = inlined_call_operand.vmem [shape: f32[4,64], index: 2, kind: input, shape index: {}]
  %s3 = inlined_call_operand.hbm [shape: f32[2,64,256], index: 3, kind: output, shape index: {}]
  %s4 = sld [smem:[#allocation0]]
  $region26: #{tpu_custom_call.1} parent=0
    _
  %s6 = ssub.s32 1, %s4
  %s7 = scalar_select 0, %s6, %s4
  $region1: #{tpu_custom_call.1} parent=0
    #allocation2 [shape = 'u8[131072]{0}', space=vmem, size = 0x20000, scoped, tag = 'input window, operand 0, single buffered']
    #allocation3 [shape = 's32[1]{0}', space=sflag, size = 0x4, scoped, tag = 'scoped memory for tpu_custom_call.1']
    #allocation4 [shape = 's32[1]{0}', space=sflag, size = 0x4, scoped, tag = 'scoped memory for tpu_custom_call.1']
    #allocation5 [shape = 'u8[131072]{0}', space=vmem, size = 0x20000, scoped, tag = 'output window, operand 0, single buffered']
    %8 = vsyncpa [#allocation3], 0
    %9 = vsyncpa [#allocation4], 0
    // Predicated region
    $region2: #{tpu_custom_call.1} parent=1 // pred_check
      _
    $region3: #{tpu_custom_call.1} parent=1 // pred_check_branch
      %11 = sbr.rel (0) target = $region5
    $region4: #{tpu_custom_call.1} parent=1 // pred_region
      %s13 = ssub.s32 4096, 4096
      %14 = vsyncadd [#allocation3], %s13
      %s15 = sshll.u32 [#allocation2], 4
      %s16 = int_to_ptr.vmem [resolvable:$true] %s15
      %21 = dma.hbm_to_vmem [thread:$0]  %s0, 4096, %s16, [#allocation3], 256, 256, 16
    $region5: #{tpu_custom_call.1} parent=1 // pred_fallthru
      _
    // Predicated region
    $region6: #{tpu_custom_call.1} parent=1 // pred_check
      _
    $region7: #{tpu_custom_call.1} parent=1 // pred_check_branch
      %23 = sbr.rel (0) target = $region9
    $region8: #{tpu_custom_call.1} parent=1 // pred_region
      _
    $region9: #{tpu_custom_call.1} parent=1 // pred_fallthru
      _
    // Predicated region
    $region10: #{tpu_custom_call.1} parent=1 // pred_check
      _
    $region11: #{tpu_custom_call.1} parent=1 // pred_check_branch
      %25 = sbr.rel (0) target = $region13
    $region12: #{tpu_custom_call.1} parent=1 // pred_region
      _
    $region13: #{tpu_custom_call.1} parent=1 // pred_fallthru
      _
    // Predicated region
    $region14: #{tpu_custom_call.1} parent=1 // pred_check
      _
    $region15: #{tpu_custom_call.1} parent=1 // pred_check_branch
      %27 = sbr.rel (0) target = $region17
    $region16: #{tpu_custom_call.1} parent=1 // pred_region
      %28 = dma.done [#allocation3], 4096
    $region17: #{tpu_custom_call.1} parent=1 // pred_fallthru
      _
    %v29 = vld [vmem:[#allocation2] sm:$0xff]
    %v30 = vld [vmem:[#allocation2 + $0x8] sm:$0xff]
    %v31 = vld [vmem:[#allocation2 + $0x10] sm:$0xff]
    %v32 = vld [vmem:[#allocation2 + $0x18] sm:$0xff]
    %v33 = vld [vmem:[#allocation2 + $0x20] sm:$0xff]
    %v34 = vld [vmem:[#allocation2 + $0x28] sm:$0xff]
    %v35 = vld [vmem:[#allocation2 + $0x30] sm:$0xff]
    %v36 = vld [vmem:[#allocation2 + $0x38] sm:$0xff]
    %v37 = vld [vmem:[#allocation2 + $0x40] sm:$0xff]
    %v38 = vld [vmem:[#allocation2 + $0x48] sm:$0xff]
    %v39 = vld [vmem:[#allocation2 + $0x50] sm:$0xff]
    %v40 = vld [vmem:[#allocation2 + $0x58] sm:$0xff]
    %v41 = vld [vmem:[#allocation2 + $0x60] sm:$0xff]
    %v42 = vld [vmem:[#allocation2 + $0x68] sm:$0xff]
    %v43 = vld [vmem:[#allocation2 + $0x70] sm:$0xff]
    %v44 = vld [vmem:[#allocation2 + $0x78] sm:$0xff]
    %v45 = vld [vmem:[#allocation2 + $0x80] sm:$0xff]
    %v46 = vld [vmem:[#allocation2 + $0x88] sm:$0xff]
    %v47 = vld [vmem:[#allocation2 + $0x90] sm:$0xff]
    %v48 = vld [vmem:[#allocation2 + $0x98] sm:$0xff]
    %v49 = vld [vmem:[#allocation2 + $0xa0] sm:$0xff]
    %v50 = vld [vmem:[#allocation2 + $0xa8] sm:$0xff]
    %v51 = vld [vmem:[#allocation2 + $0xb0] sm:$0xff]
    %v52 = vld [vmem:[#allocation2 + $0xb8] sm:$0xff]
    %v53 = vld [vmem:[#allocation2 + $0xc0] sm:$0xff]
    %v54 = vld [vmem:[#allocation2 + $0xc8] sm:$0xff]
    %v55 = vld [vmem:[#allocation2 + $0xd0] sm:$0xff]
    %v56 = vld [vmem:[#allocation2 + $0xd8] sm:$0xff]
    %v57 = vld [vmem:[#allocation2 + $0xe0] sm:$0xff]
    %v58 = vld [vmem:[#allocation2 + $0xe8] sm:$0xff]
    %v59 = vld [vmem:[#allocation2 + $0xf0] sm:$0xff]
    %v60 = vld [vmem:[#allocation2 + $0xf8] sm:$0xff]
    %v61 = vadd.f32 %v29, %v30
    %62 = vadd.xlane.f32.xlu0 %v61
    %v63 = vpop.xlane.xlu0 %62
    %v64 = vadd.f32 %v31, %v32
    %65 = vadd.xlane.f32.xlu0 %v64
    %v66 = vpop.xlane.xlu0 %65
    %v67 = vadd.f32 %v33, %v34
    %68 = vadd.xlane.f32.xlu0 %v67
    %v69 = vpop.xlane.xlu0 %68
    %v70 = vadd.f32 %v35, %v36
    %71 = vadd.xlane.f32.xlu0 %v70
    %v72 = vpop.xlane.xlu0 %71
    %v73 = vadd.f32 %v37, %v38
    %74 = vadd.xlane.f32.xlu0 %v73
    %v75 = vpop.xlane.xlu0 %74
    %v76 = vadd.f32 %v39, %v40
    %77 = vadd.xlane.f32.xlu0 %v76
    %v78 = vpop.xlane.xlu0 %77
    %v79 = vadd.f32 %v41, %v42
    %80 = vadd.xlane.f32.xlu0 %v79
    %v81 = vpop.xlane.xlu0 %80
    %v82 = vadd.f32 %v43, %v44
    %83 = vadd.xlane.f32.xlu0 %v82
    %v84 = vpop.xlane.xlu0 %83
    %v85 = vadd.f32 %v45, %v46
    %86 = vadd.xlane.f32.xlu0 %v85
    %v87 = vpop.xlane.xlu0 %86
    %v88 = vadd.f32 %v47, %v48
    %89 = vadd.xlane.f32.xlu0 %v88
    %v90 = vpop.xlane.xlu0 %89
    %v91 = vadd.f32 %v49, %v50
    %92 = vadd.xlane.f32.xlu0 %v91
    %v93 = vpop.xlane.xlu0 %92
    %v94 = vadd.f32 %v51, %v52
    %95 = vadd.xlane.f32.xlu0 %v94
    %v96 = vpop.xlane.xlu0 %95
    %v97 = vadd.f32 %v53, %v54
    %98 = vadd.xlane.f32.xlu0 %v97
    %v99 = vpop.xlane.xlu0 %98
    %v100 = vadd.f32 %v55, %v56
    %101 = vadd.xlane.f32.xlu0 %v100
    %v102 = vpop.xlane.xlu0 %101
    %v103 = vadd.f32 %v57, %v58
    %104 = vadd.xlane.f32.xlu0 %v103
    %v105 = vpop.xlane.xlu0 %104
    %v106 = vadd.f32 %v59, %v60
    %107 = vadd.xlane.f32.xlu0 %v106
    %v108 = vpop.xlane.xlu0 %107
    %v109 = vmul.f32 %v63, 0.00390625
    %v110 = vmul.f32 %v66, 0.00390625
    %v111 = vmul.f32 %v69, 0.00390625
    %v112 = vmul.f32 %v72, 0.00390625
    %v113 = vmul.f32 %v75, 0.00390625
    %v114 = vmul.f32 %v78, 0.00390625
    %v115 = vmul.f32 %v81, 0.00390625
    %v116 = vmul.f32 %v84, 0.00390625
    %v117 = vmul.f32 %v87, 0.00390625
    %v118 = vmul.f32 %v90, 0.00390625
    %v119 = vmul.f32 %v93, 0.00390625
    %v120 = vmul.f32 %v96, 0.00390625
    %v121 = vmul.f32 %v99, 0.00390625
    %v122 = vmul.f32 %v102, 0.00390625
    %v123 = vmul.f32 %v105, 0.00390625
    %v124 = vmul.f32 %v108, 0.00390625
    %v125 = vmax.f32 %v29, %v30
    %126 = vmax.xlane.f32.xlu0 %v125
    %v127 = vpop.xlane.xlu0 %126
    %v128 = vmax.f32 %v31, %v32
    %129 = vmax.xlane.f32.xlu0 %v128
    %v130 = vpop.xlane.xlu0 %129
    %v131 = vmax.f32 %v33, %v34
    %132 = vmax.xlane.f32.xlu0 %v131
    %v133 = vpop.xlane.xlu0 %132
    %v134 = vmax.f32 %v35, %v36
    %135 = vmax.xlane.f32.xlu0 %v134
    %v136 = vpop.xlane.xlu0 %135
    %v137 = vmax.f32 %v37, %v38
    %138 = vmax.xlane.f32.xlu0 %v137
    %v139 = vpop.xlane.xlu0 %138
    %v140 = vmax.f32 %v39, %v40
    %141 = vmax.xlane.f32.xlu0 %v140
    %v142 = vpop.xlane.xlu0 %141
    %v143 = vmax.f32 %v41, %v42
    %144 = vmax.xlane.f32.xlu0 %v143
    %v145 = vpop.xlane.xlu0 %144
    %v146 = vmax.f32 %v43, %v44
    %147 = vmax.xlane.f32.xlu0 %v146
    %v148 = vpop.xlane.xlu0 %147
    %v149 = vmax.f32 %v45, %v46
    %150 = vmax.xlane.f32.xlu0 %v149
    %v151 = vpop.xlane.xlu0 %150
    %v152 = vmax.f32 %v47, %v48
    %153 = vmax.xlane.f32.xlu0 %v152
    %v154 = vpop.xlane.xlu0 %153
    %v155 = vmax.f32 %v49, %v50
    %156 = vmax.xlane.f32.xlu0 %v155
    %v157 = vpop.xlane.xlu0 %156
    %v158 = vmax.f32 %v51, %v52
    %159 = vmax.xlane.f32.xlu0 %v158
    %v160 = vpop.xlane.xlu0 %159
    %v161 = vmax.f32 %v53, %v54
    %162 = vmax.xlane.f32.xlu0 %v161
    %v163 = vpop.xlane.xlu0 %162
    %v164 = vmax.f32 %v55, %v56
    %165 = vmax.xlane.f32.xlu0 %v164
    %v166 = vpop.xlane.xlu0 %165
    %v167 = vmax.f32 %v57, %v58
    %168 = vmax.xlane.f32.xlu0 %v167
    %v169 = vpop.xlane.xlu0 %168
    %v170 = vmax.f32 %v59, %v60
    %171 = vmax.xlane.f32.xlu0 %v170
    %v172 = vpop.xlane.xlu0 %171
    %v189 = vlaneseq
    %v190 = vand.u32 %v189, 127
    %v191 = vlaneseq
    %v192 = vshrl.u32 %v191, 7
    %v193 = vsub.s32 %v190, %v192
    %v194 = vrot.slane %v109, %v193
    %v195 = vadd.s32 %v190, 4294967288
    %v196 = vlaneseq
    %v197 = vshrl.u32 %v196, 7
    %v198 = vsub.s32 %v195, %v197
    %v199 = vrot.slane %v110, %v198
    %vm200 = vcmask 130112
    %v201 = vsel %vm200, %v199, %v194
    %v202 = vadd.s32 %v190, 4294967280
    %v203 = vlaneseq
    %v204 = vshrl.u32 %v203, 7
    %v205 = vsub.s32 %v202, %v204
    %v206 = vrot.slane %v111, %v205
    %vm207 = vcmask 195712
    %v208 = vsel %vm207, %v206, %v201
    %v209 = vadd.s32 %v190, 4294967272
    %v210 = vlaneseq
    %v211 = vshrl.u32 %v210, 7
    %v212 = vsub.s32 %v209, %v211
    %v213 = vrot.slane %v112, %v212
    %vm214 = vcmask 261312
    %v215 = vsel %vm214, %v213, %v208
    %v216 = vadd.s32 %v190, 4294967264
    %v217 = vlaneseq
    %v218 = vshrl.u32 %v217, 7
    %v219 = vsub.s32 %v216, %v218
    %v220 = vrot.slane %v113, %v219
    %vm221 = vcmask 326912
    %v222 = vsel %vm221, %v220, %v215
    %v223 = vadd.s32 %v190, 4294967256
    %v224 = vlaneseq
    %v225 = vshrl.u32 %v224, 7
    %v226 = vsub.s32 %v223, %v225
    %v227 = vrot.slane %v114, %v226
    %vm228 = vcmask 392512
    %v229 = vsel %vm228, %v227, %v222
    %v230 = vadd.s32 %v190, 4294967248
    %v231 = vlaneseq
    %v232 = vshrl.u32 %v231, 7
    %v233 = vsub.s32 %v230, %v232
    %v234 = vrot.slane %v115, %v233
    %vm235 = vcmask 458112
    %v236 = vsel %vm235, %v234, %v229
    %v237 = vadd.s32 %v190, 4294967240
    %v238 = vlaneseq
    %v239 = vshrl.u32 %v238, 7
    %v240 = vsub.s32 %v237, %v239
    %v241 = vrot.slane %v116, %v240
    %vm242 = vcmask 523712
    %v243 = vsel %vm242, %v241, %v236
    %v244 = vlaneseq
    %v245 = vshrl.u32 %v244, 7
    %v246 = vsub.s32 %v190, %v245
    %v247 = vrot.slane %v117, %v246
    %v248 = vlaneseq
    %v249 = vshrl.u32 %v248, 7
    %v250 = vsub.s32 %v195, %v249
    %v251 = vrot.slane %v118, %v250
    %v252 = vsel %vm200, %v251, %v247
    %v253 = vlaneseq
    %v254 = vshrl.u32 %v253, 7
    %v255 = vsub.s32 %v202, %v254
    %v256 = vrot.slane %v119, %v255
    %v257 = vsel %vm207, %v256, %v252
    %v258 = vlaneseq
    %v259 = vshrl.u32 %v258, 7
    %v260 = vsub.s32 %v209, %v259
    %v261 = vrot.slane %v120, %v260
    %v262 = vsel %vm214, %v261, %v257
    %v263 = vlaneseq
    %v264 = vshrl.u32 %v263, 7
    %v265 = vsub.s32 %v216, %v264
    %v266 = vrot.slane %v121, %v265
    %v267 = vsel %vm221, %v266, %v262
    %v268 = vlaneseq
    %v269 = vshrl.u32 %v268, 7
    %v270 = vsub.s32 %v223, %v269
    %v271 = vrot.slane %v122, %v270
    %v272 = vsel %vm228, %v271, %v267
    %v273 = vlaneseq
    %v274 = vshrl.u32 %v273, 7
    %v275 = vsub.s32 %v230, %v274
    %v276 = vrot.slane %v123, %v275
    %v277 = vsel %vm235, %v276, %v272
    %v278 = vlaneseq
    %v279 = vshrl.u32 %v278, 7
    %v280 = vsub.s32 %v237, %v279
    %v281 = vrot.slane %v124, %v280
    %v282 = vsel %vm242, %v281, %v277
    %vm283 = vcmask 1041409
    %v284 = vsel %vm283, %v282, %v243
    %v302 = vlaneseq
    %v303 = vshrl.u32 %v302, 7
    %v304 = vsub.s32 %v190, %v303
    %v305 = vrot.slane %v127, %v304
    %v306 = vlaneseq
    %v307 = vshrl.u32 %v306, 7
    %v308 = vsub.s32 %v195, %v307
    %v309 = vrot.slane %v130, %v308
    %v310 = vsel %vm200, %v309, %v305
    %v311 = vlaneseq
    %v312 = vshrl.u32 %v311, 7
    %v313 = vsub.s32 %v202, %v312
    %v314 = vrot.slane %v133, %v313
    %v315 = vsel %vm207, %v314, %v310
    %v316 = vlaneseq
    %v317 = vshrl.u32 %v316, 7
    %v318 = vsub.s32 %v209, %v317
    %v319 = vrot.slane %v136, %v318
    %v320 = vsel %vm214, %v319, %v315
    %v321 = vlaneseq
    %v322 = vshrl.u32 %v321, 7
    %v323 = vsub.s32 %v216, %v322
    %v324 = vrot.slane %v139, %v323
    %v325 = vsel %vm221, %v324, %v320
    %v326 = vlaneseq
    %v327 = vshrl.u32 %v326, 7
    %v328 = vsub.s32 %v223, %v327
    %v329 = vrot.slane %v142, %v328
    %v330 = vsel %vm228, %v329, %v325
    %v331 = vlaneseq
    %v332 = vshrl.u32 %v331, 7
    %v333 = vsub.s32 %v230, %v332
    %v334 = vrot.slane %v145, %v333
    %v335 = vsel %vm235, %v334, %v330
    %v336 = vlaneseq
    %v337 = vshrl.u32 %v336, 7
    %v338 = vsub.s32 %v237, %v337
    %v339 = vrot.slane %v148, %v338
    %v340 = vsel %vm242, %v339, %v335
    %v341 = vlaneseq
    %v342 = vshrl.u32 %v341, 7
    %v343 = vsub.s32 %v190, %v342
    %v344 = vrot.slane %v151, %v343
    %v345 = vlaneseq
    %v346 = vshrl.u32 %v345, 7
    %v347 = vsub.s32 %v195, %v346
    %v348 = vrot.slane %v154, %v347
    %v349 = vsel %vm200, %v348, %v344
    %v350 = vlaneseq
    %v351 = vshrl.u32 %v350, 7
    %v352 = vsub.s32 %v202, %v351
    %v353 = vrot.slane %v157, %v352
    %v354 = vsel %vm207, %v353, %v349
    %v355 = vlaneseq
    %v356 = vshrl.u32 %v355, 7
    %v357 = vsub.s32 %v209, %v356
    %v358 = vrot.slane %v160, %v357
    %v359 = vsel %vm214, %v358, %v354
    %v360 = vlaneseq
    %v361 = vshrl.u32 %v360, 7
    %v362 = vsub.s32 %v216, %v361
    %v363 = vrot.slane %v163, %v362
    %v364 = vsel %vm221, %v363, %v359
    %v365 = vlaneseq
    %v366 = vshrl.u32 %v365, 7
    %v367 = vsub.s32 %v223, %v366
    %v368 = vrot.slane %v166, %v367
    %v369 = vsel %vm228, %v368, %v364
    %v370 = vlaneseq
    %v371 = vshrl.u32 %v370, 7
    %v372 = vsub.s32 %v230, %v371
    %v373 = vrot.slane %v169, %v372
    %v374 = vsel %vm235, %v373, %v369
    %v375 = vlaneseq
    %v376 = vshrl.u32 %v375, 7
    %v377 = vsub.s32 %v237, %v376
    %v378 = vrot.slane %v172, %v377
    %v379 = vsel %vm242, %v378, %v374
    %vm380 = vcmask 1043459
    %v381 = vsel %vm380, %v379, %v340
    %vm383 = vcmask 1041408
    %v384 = vsel %vm383, %v284, %v381
    %v385 = vld [vmem:[%s1] sm:$0xff]
    %v386 = vld [vmem:[%s1 + $0x8] sm:$0xff]
    %v387 = vld [vmem:[%s1 + $0x10] sm:$0xff]
    %v388 = vld [vmem:[%s1 + $0x18] sm:$0xff]
    %v389 = vld [vmem:[%s1 + $0x20] sm:$0xff]
    %v390 = vld [vmem:[%s1 + $0x28] sm:$0xff]
    %v391 = vld [vmem:[%s1 + $0x30] sm:$0xff]
    %v392 = vld [vmem:[%s1 + $0x38] sm:$0xff]
    %vm393 = vcmask 523264
    %v395 = vsel %vm393, %v384, 0
    %397 = vmatprep.subr.mxu0 0.0
    %398 = vmatpush1.msra.mxu0 %v385
    %399 = vmatprep.subr.mxu0 0.0
    %400 = vmatpush1.msra.mxu0 %v386
    %401 = vmatprep.subr.mxu0 0.0
    %402 = vmatpush1.msra.mxu0 %v387
    %403 = vmatprep.subr.mxu0 0.0
    %404 = vmatpush1.msra.mxu0 %v388
    %405 = vmatprep.subr.mxu0 0.0
    %406 = vmatpush1.msra.mxu0 %v389
    %407 = vmatprep.subr.mxu0 0.0
    %408 = vmatpush1.msra.mxu0 %v390
    %409 = vmatprep.subr.mxu0 0.0
    %410 = vmatpush1.msra.mxu0 %v391
    %411 = vmatprep.subr.mxu0 0.0
    %412 = vmatpush1.msra.mxu0 %v392
    %413 = vmatprep.subr.mxu0 0.0
    %414 = vmatpush1.msra.mxu0 0.0
    %415 = vmatprep.subr.mxu0 0.0
    %416 = vmatpush1.msra.mxu0 0.0
    %417 = vmatprep.subr.mxu0 0.0
    %418 = vmatpush1.msra.mxu0 0.0
    %419 = vmatprep.subr.mxu0 0.0
    %420 = vmatpush1.msra.mxu0 0.0
    %421 = vmatprep.subr.mxu0 0.0
    %422 = vmatpush1.msra.mxu0 0.0
    %423 = vmatprep.subr.mxu0 0.0
    %424 = vmatpush1.msra.mxu0 0.0
    %425 = vmatprep.subr.mxu0 0.0
    %426 = vmatpush1.msra.mxu0 0.0
    %427 = vmatprep.subr.mxu0 0.0
    %428 = vmatpush1.msra.mxu0 0.0
    %429 = vmatprep.subr.mxu0 0.0
    %430 = vmatpush1.msra.mxu0 0.0
    %431 = vmatprep.subr.mxu0 0.0
    %432 = vmatpush1.msra.mxu0 0.0
    %433 = vmatprep.subr.mxu0 0.0
    %434 = vmatpush1.msra.mxu0 0.0
    %435 = vmatprep.subr.mxu0 0.0
    %436 = vmatpush1.msra.mxu0 0.0
    %437 = vmatprep.subr.mxu0 0.0
    %438 = vmatpush1.msra.mxu0 0.0
    %439 = vmatprep.subr.mxu0 0.0
    %440 = vmatpush1.msra.mxu0 0.0
    %441 = vmatprep.subr.mxu0 0.0
    %442 = vmatpush1.msra.mxu0 0.0
    %443 = vmatprep.subr.mxu0 0.0
    %444 = vmatpush1.msra.mxu0 0.0
    %445 = vmatprep.subr.mxu0 0.0
    %446 = vmatpush1.msra.mxu0 0.0
    %447 = vmatprep.subr.mxu0 0.0
    %448 = vmatpush1.msra.mxu0 0.0
    %449 = vmatprep.subr.mxu0 0.0
    %450 = vmatpush1.msra.mxu0 0.0
    %451 = vmatprep.subr.mxu0 0.0
    %452 = vmatpush1.msra.mxu0 0.0
    %453 = vmatprep.subr.mxu0 0.0
    %454 = vmatpush1.msra.mxu0 0.0
    %455 = vmatprep.subr.mxu0 0.0
    %456 = vmatpush1.msra.mxu0 0.0
    %457 = vmatprep.subr.mxu0 0.0
    %458 = vmatpush1.msra.mxu0 0.0
    %459 = vmatprep.subr.mxu0 0.0
    %460 = vmatpush1.msra.mxu0 0.0
    %461 = vmatprep.mubr.f32.mxu0 0.0
    %462 = vmatmul.mubr.f32.gmra.mrb[0].mxu0 %v395
    %v463 = vpop.f32.mrb[0].mxu0
    %v464 = vadd.f32 0.0, %v463
    %v465 = vpop.f32.mrb[0].mxu0
    %466 = vdwg.mxu0
    %v467 = vmax.f32 %v464, 0.0
    %v468 = vld [vmem:[%s2] sm:$0xf]
    %vm469 = vcmask 31744
    %v471 = vsel %vm469, %v467, 0
    %vm473 = vcmask 1043456
    %v475 = vsel %vm473, %v468, 0
    %477 = vmatprep.subr.mxu0 0.0
    %478 = vmatpush1.msra.mxu0 %v475
    %479 = vmatprep.subr.mxu0 0.0
    %480 = vmatpush1.msra.mxu0 0.0
    %481 = vmatprep.subr.mxu0 0.0
    %482 = vmatpush1.msra.mxu0 0.0
    %483 = vmatprep.subr.mxu0 0.0
    %484 = vmatpush1.msra.mxu0 0.0
    %485 = vmatprep.subr.mxu0 0.0
    %486 = vmatpush1.msra.mxu0 0.0
    %487 = vmatprep.subr.mxu0 0.0
    %488 = vmatpush1.msra.mxu0 0.0
    %489 = vmatprep.subr.mxu0 0.0
    %490 = vmatpush1.msra.mxu0 0.0
    %491 = vmatprep.subr.mxu0 0.0
    %492 = vmatpush1.msra.mxu0 0.0
    %493 = vmatprep.subr.mxu0 0.0
    %494 = vmatpush1.msra.mxu0 0.0
    %495 = vmatprep.subr.mxu0 0.0
    %496 = vmatpush1.msra.mxu0 0.0
    %497 = vmatprep.subr.mxu0 0.0
    %498 = vmatpush1.msra.mxu0 0.0
    %499 = vmatprep.subr.mxu0 0.0
    %500 = vmatpush1.msra.mxu0 0.0
    %501 = vmatprep.subr.mxu0 0.0
    %502 = vmatpush1.msra.mxu0 0.0
    %503 = vmatprep.subr.mxu0 0.0
    %504 = vmatpush1.msra.mxu0 0.0
    %505 = vmatprep.subr.mxu0 0.0
    %506 = vmatpush1.msra.mxu0 0.0
    %507 = vmatprep.subr.mxu0 0.0
    %508 = vmatpush1.msra.mxu0 0.0
    %509 = vmatprep.subr.mxu0 0.0
    %510 = vmatpush1.msra.mxu0 0.0
    %511 = vmatprep.subr.mxu0 0.0
    %512 = vmatpush1.msra.mxu0 0.0
    %513 = vmatprep.subr.mxu0 0.0
    %514 = vmatpush1.msra.mxu0 0.0
    %515 = vmatprep.subr.mxu0 0.0
    %516 = vmatpush1.msra.mxu0 0.0
    %517 = vmatprep.subr.mxu0 0.0
    %518 = vmatpush1.msra.mxu0 0.0
    %519 = vmatprep.subr.mxu0 0.0
    %520 = vmatpush1.msra.mxu0 0.0
    %521 = vmatprep.subr.mxu0 0.0
    %522 = vmatpush1.msra.mxu0 0.0
    %523 = vmatprep.subr.mxu0 0.0
    %524 = vmatpush1.msra.mxu0 0.0
    %525 = vmatprep.subr.mxu0 0.0
    %526 = vmatpush1.msra.mxu0 0.0
    %527 = vmatprep.subr.mxu0 0.0
    %528 = vmatpush1.msra.mxu0 0.0
    %529 = vmatprep.subr.mxu0 0.0
    %530 = vmatpush1.msra.mxu0 0.0
    %531 = vmatprep.subr.mxu0 0.0
    %532 = vmatpush1.msra.mxu0 0.0
    %533 = vmatprep.subr.mxu0 0.0
    %534 = vmatpush1.msra.mxu0 0.0
    %535 = vmatprep.subr.mxu0 0.0
    %536 = vmatpush1.msra.mxu0 0.0
    %537 = vmatprep.subr.mxu0 0.0
    %538 = vmatpush1.msra.mxu0 0.0
    %539 = vmatprep.subr.mxu0 0.0
    %540 = vmatpush1.msra.mxu0 0.0
    %541 = vmatprep.mubr.f32.mxu0 0.0
    %542 = vmatmul.mubr.f32.gmra.mrb[0].mxu0 %v471
    %v543 = vpop.f32.mrb[0].mxu0
    %v544 = vadd.f32 0.0, %v543
    %v545 = vpop.f32.mrb[0].mxu0
    %546 = vdwg.mxu0
    %v548 = vrot.slane %v544, 2
    %v550 = vadd.f32 %v544, %v548
    %v551 = vxor.u32 %v550, 2147483648
    %v552 = vmul.f32 %v551, 1.442695
    %v553 = vpow.pop %v552
    %v554 = vadd.f32 %v553, 1.0
    %v555 = vrcp.pop %v554
    %v556 = vmul.f32 1.0, %v555
    %v557 = vlaneseq
    %v558 = vshrl.u32 %v557, 7
    %v559 = vsub.s32 0, %v558
    %v560 = vrot.slane %v556, %v559
    %562 = vbcast.lane.b32.xlu0 %v560, 256
    %v563 = vpop.permute.xlu0 %562
    %s565 = sor.u32 256, 8
    %566 = vbcast.lane.b32.xlu0 %v560, %s565
    %v567 = vpop.permute.xlu0 %566
    %s569 = sor.u32 256, 16
    %570 = vbcast.lane.b32.xlu0 %v560, %s569
    %v571 = vpop.permute.xlu0 %570
    %s573 = sor.u32 256, 24
    %574 = vbcast.lane.b32.xlu0 %v560, %s573
    %v575 = vpop.permute.xlu0 %574
    %s577 = sor.u32 256, 32
    %578 = vbcast.lane.b32.xlu0 %v560, %s577
    %v579 = vpop.permute.xlu0 %578
    %s581 = sor.u32 256, 40
    %582 = vbcast.lane.b32.xlu0 %v560, %s581
    %v583 = vpop.permute.xlu0 %582
    %s585 = sor.u32 256, 48
    %586 = vbcast.lane.b32.xlu0 %v560, %s585
    %v587 = vpop.permute.xlu0 %586
    %s589 = sor.u32 256, 56
    %590 = vbcast.lane.b32.xlu0 %v560, %s589
    %v591 = vpop.permute.xlu0 %590
    %v592 = vlaneseq
    %v593 = vshrl.u32 %v592, 7
    %v594 = vsub.s32 1, %v593
    %v595 = vrot.slane %v556, %v594
    %597 = vbcast.lane.b32.xlu0 %v595, 256
    %v598 = vpop.permute.xlu0 %597
    %s600 = sor.u32 256, 8
    %601 = vbcast.lane.b32.xlu0 %v595, %s600
    %v602 = vpop.permute.xlu0 %601
    %s604 = sor.u32 256, 16
    %605 = vbcast.lane.b32.xlu0 %v595, %s604
    %v606 = vpop.permute.xlu0 %605
    %s608 = sor.u32 256, 24
    %609 = vbcast.lane.b32.xlu0 %v595, %s608
    %v610 = vpop.permute.xlu0 %609
    %s612 = sor.u32 256, 32
    %613 = vbcast.lane.b32.xlu0 %v595, %s612
    %v614 = vpop.permute.xlu0 %613
    %s616 = sor.u32 256, 40
    %617 = vbcast.lane.b32.xlu0 %v595, %s616
    %v618 = vpop.permute.xlu0 %617
    %s620 = sor.u32 256, 48
    %621 = vbcast.lane.b32.xlu0 %v595, %s620
    %v622 = vpop.permute.xlu0 %621
    %s624 = sor.u32 256, 56
    %625 = vbcast.lane.b32.xlu0 %v595, %s624
    %v626 = vpop.permute.xlu0 %625
    %v627 = vmul.f32 %v29, %v563
    %v628 = vmul.f32 %v30, %v563
    %v629 = vmul.f32 %v31, %v567
    %v630 = vmul.f32 %v32, %v567
    %v631 = vmul.f32 %v33, %v571
    %v632 = vmul.f32 %v34, %v571
    %v633 = vmul.f32 %v35, %v575
    %v634 = vmul.f32 %v36, %v575
    %v635 = vmul.f32 %v37, %v579
    %v636 = vmul.f32 %v38, %v579
    %v637 = vmul.f32 %v39, %v583
    %v638 = vmul.f32 %v40, %v583
    %v639 = vmul.f32 %v41, %v587
    %v640 = vmul.f32 %v42, %v587
    %v641 = vmul.f32 %v43, %v591
    %v642 = vmul.f32 %v44, %v591
    %v643 = vmul.f32 %v45, %v598
    %v644 = vmul.f32 %v46, %v598
    %v645 = vmul.f32 %v47, %v602
    %v646 = vmul.f32 %v48, %v602
    %v647 = vmul.f32 %v49, %v606
    %v648 = vmul.f32 %v50, %v606
    %v649 = vmul.f32 %v51, %v610
    %v650 = vmul.f32 %v52, %v610
    %v651 = vmul.f32 %v53, %v614
    %v652 = vmul.f32 %v54, %v614
    %v653 = vmul.f32 %v55, %v618
    %v654 = vmul.f32 %v56, %v618
    %v655 = vmul.f32 %v57, %v622
    %v656 = vmul.f32 %v58, %v622
    %v657 = vmul.f32 %v59, %v626
    %v658 = vmul.f32 %v60, %v626
    %659 = vst [vmem:[#allocation5] sm:$0xff] %v627
    %660 = vst [vmem:[#allocation5 + $0x8] sm:$0xff] %v628
    %661 = vst [vmem:[#allocation5 + $0x10] sm:$0xff] %v629
    %662 = vst [vmem:[#allocation5 + $0x18] sm:$0xff] %v630
    %663 = vst [vmem:[#allocation5 + $0x20] sm:$0xff] %v631
    %664 = vst [vmem:[#allocation5 + $0x28] sm:$0xff] %v632
    %665 = vst [vmem:[#allocation5 + $0x30] sm:$0xff] %v633
    %666 = vst [vmem:[#allocation5 + $0x38] sm:$0xff] %v634
    %667 = vst [vmem:[#allocation5 + $0x40] sm:$0xff] %v635
    %668 = vst [vmem:[#allocation5 + $0x48] sm:$0xff] %v636
    %669 = vst [vmem:[#allocation5 + $0x50] sm:$0xff] %v637
    %670 = vst [vmem:[#allocation5 + $0x58] sm:$0xff] %v638
    %671 = vst [vmem:[#allocation5 + $0x60] sm:$0xff] %v639
    %672 = vst [vmem:[#allocation5 + $0x68] sm:$0xff] %v640
    %673 = vst [vmem:[#allocation5 + $0x70] sm:$0xff] %v641
    %674 = vst [vmem:[#allocation5 + $0x78] sm:$0xff] %v642
    %675 = vst [vmem:[#allocation5 + $0x80] sm:$0xff] %v643
    %676 = vst [vmem:[#allocation5 + $0x88] sm:$0xff] %v644
    %677 = vst [vmem:[#allocation5 + $0x90] sm:$0xff] %v645
    %678 = vst [vmem:[#allocation5 + $0x98] sm:$0xff] %v646
    %679 = vst [vmem:[#allocation5 + $0xa0] sm:$0xff] %v647
    %680 = vst [vmem:[#allocation5 + $0xa8] sm:$0xff] %v648
    %681 = vst [vmem:[#allocation5 + $0xb0] sm:$0xff] %v649
    %682 = vst [vmem:[#allocation5 + $0xb8] sm:$0xff] %v650
    %683 = vst [vmem:[#allocation5 + $0xc0] sm:$0xff] %v651
    %684 = vst [vmem:[#allocation5 + $0xc8] sm:$0xff] %v652
    %685 = vst [vmem:[#allocation5 + $0xd0] sm:$0xff] %v653
    %686 = vst [vmem:[#allocation5 + $0xd8] sm:$0xff] %v654
    %687 = vst [vmem:[#allocation5 + $0xe0] sm:$0xff] %v655
    %688 = vst [vmem:[#allocation5 + $0xe8] sm:$0xff] %v656
    %689 = vst [vmem:[#allocation5 + $0xf0] sm:$0xff] %v657
    %690 = vst [vmem:[#allocation5 + $0xf8] sm:$0xff] %v658
    // Predicated region
    $region18: #{tpu_custom_call.1} parent=1 // pred_check
      _
    $region19: #{tpu_custom_call.1} parent=1 // pred_check_branch
      %692 = sbr.rel (0) target = $region21
    $region20: #{tpu_custom_call.1} parent=1 // pred_region
      %s694 = ssub.s32 4096, 4096
      %695 = vsyncadd [#allocation4], %s694
      %s696 = sshll.u32 [#allocation5], 4
      %s697 = int_to_ptr.vmem [resolvable:$true] %s696
      %702 = dma.vmem_to_hbm [thread:$0]  %s697, 4096, %s3, [#allocation4], 256, 256, 16
    $region21: #{tpu_custom_call.1} parent=1 // pred_fallthru
      _
    // Predicated region
    $region22: #{tpu_custom_call.1} parent=1 // pred_check
      _
    $region23: #{tpu_custom_call.1} parent=1 // pred_check_branch
      %704 = sbr.rel (0) target = $region25
    $region24: #{tpu_custom_call.1} parent=1 // pred_region
      %705 = dma.done [#allocation4], 4096
    $region25: #{tpu_custom_call.1} parent=1 // pred_fallthru
      _
    %706 = vsyncpa [#allocation3], 1
    %707 = vsyncpa [#allocation4], 1

</llo_original>
